<compile_context>
chip_gen: v5e
topology: v5e:2x2
jax: 0.10.0
libtpu: 0.0.40
codegen_flags: <defaults>
</compile_context>

<pallas_src>
import numpy as np
import jax
import jax.numpy as jnp
from jax import lax
from jax.experimental import pallas as pl
from jax.experimental.pallas import tpu as pltpu


# --------------------------------------------------------------------------
# Fused Pallas kernel
# --------------------------------------------------------------------------

def _make_fused_kernel(cfg, training):
    n_conv = cfg["n_conv"]
    conv_meta = cfg["conv_meta"]        # per conv: dict(rs, L_out, cout)
    adapt = cfg["adapt"]                # None or dict(kh, kw, rs, lane_stride, L)
    M = cfg["M"]
    cls_res = cfg["cls_res"]
    n_hidden_fc = cfg["n_hidden_fc"]

    def kernel(*refs):
        out_ref = refs[-1]
        it = iter(refs[:-1])

        def dotf(a, b):
            return jnp.dot(a, b, preferred_element_type=jnp.float32)

        act = next(it)[...]                      # (M, L0): rows=(n,h), lanes=(w,c)

        # --- ConvBlock (3x3 conv + bias + ReLU) followed by MaxPool2d(2) ---
        for ci in range(n_conv):
            mask_ref = next(it)   # (2, M, 1)     boundary masks for dh=0 / dh=2 rolls
            band_ref = next(it)   # (3, Lin, Lout) band mats (dw taps + pad + compaction)
            bias_ref = next(it)   # (1, Lout)

            rs = conv_meta[ci]["rs"]
            L_out = conv_meta[ci]["L_out"]
            cout = conv_meta[ci]["cout"]

            # kernel-row shifts on the XLU (sublane rolls); boundary rows zeroed
            up = pltpu.roll(act, rs, 0) * mask_ref[0]        # spatial row h-1
            dn = pltpu.roll(act, M - rs, 0) * mask_ref[1]    # spatial row h+1
            z = (dotf(act, band_ref[1])
                 + dotf(up, band_ref[0])
                 + dotf(dn, band_ref[2]))

            # 2x2 max pool: adjacent columns (lane roll) then adjacent rows
            # (sublane roll).  Valid (even) rows/cols always pair in-sample,
            # so no masks are needed here.
            z = jnp.maximum(z, pltpu.roll(z, L_out - cout, 1))
            z = jnp.maximum(z, pltpu.roll(z, M - rs, 0))

            # bias + ReLU (commute with the max pool)
            act = jnp.maximum(z + bias_ref[...], 0.0)

        # --- AdaptiveMaxPool2d (divisible case); identity when window == 1 ---
        if adapt is not None:
            kh, kw = adapt["kh"], adapt["kw"]
            ls, ars, L = adapt["lane_stride"], adapt["rs"], adapt["L"]
            base = act
            for a in range(1, kw):
                act = jnp.maximum(act, pltpu.roll(base, L - a * ls, 1))
            base = act
            for a in range(1, kh):
                act = jnp.maximum(act, pltpu.roll(base, M - a * ars, 0))

        # --- flatten + fc1 (+ReLU): R independent heavy matmuls, then ONE
        #     stacked one-hot selector contraction. ---
        sel_ref = next(it)     # (N, R*M)
        w1e_ref = next(it)     # (R, L_act, F1)  fc1 slabs in (row j, lane) layout
        b1_ref = next(it)      # (1, F1)
        zcat = jnp.concatenate([dotf(act, w1e_ref[j]) for j in range(cls_res)],
                               axis=0)                       # (R*M, F1)
        h = jnp.maximum(dotf(sel_ref[...], zcat) + b1_ref[...], 0.0)

        # --- remaining hidden Linear(+ReLU) layers ---
        for _ in range(n_hidden_fc - 1):
            w_ref = next(it)
            b_ref = next(it)
            h = jnp.maximum(dotf(h, w_ref[...]) + b_ref[...], 0.0)

        # --- final Linear + softmax / log_softmax ---
        wf_ref = next(it)
        bf_ref = next(it)
        logits = dotf(h, wf_ref[...]) + bf_ref[...]
        m = jnp.max(logits, axis=-1, keepdims=True)
        zc = logits - m
        e = jnp.exp(zc)
        s = jnp.sum(e, axis=-1, keepdims=True)
        if training:
            out_ref[...] = zc - jnp.log(s)       # F.log_softmax
        else:
            out_ref[...] = e / s                 # F.softmax

    return kernel


# --------------------------------------------------------------------------
# One-time parameter preparation: all conv/pool/flatten index bookkeeping is
# folded into small static band / mask / selector arrays built on the host.
# --------------------------------------------------------------------------

def prepare_kernel_params(params, input_shape_nchw, cls_input_res):
    N, C0, H0, W0 = (int(d) for d in input_shape_nchw)
    M = N * H0

    operands = []
    conv_meta = []
    H, W, Cin = H0, W0, C0
    rs = 1              # row stride between valid spatial rows in the (n,h) row axis
    lane_stride = C0    # lane distance between valid spatial-column blocks
    L_act = W0 * C0     # physical lane width of the current activation

    for (wconv, bconv) in params["convs"]:
        wnp = np.asarray(wconv, dtype=np.float32)          # (Cout, Cin, 3, 3)
        bnp = np.asarray(bconv, dtype=np.float32)
        Cout = int(wnp.shape[0])
        L_out = W * Cout

        # Boundary masks (zero padding) for the dh=0 / dh=2 row rolls.
        masks = np.ones((2, M, 1), np.float32)
        for n in range(N):
            masks[0, n * H0, 0] = 0.0                      # h == 0 has no row above
            masks[1, n * H0 + (H - 1) * rs, 0] = 0.0       # h == H-1 has no row below

        # Band matrices: fold the 3 dw taps, the zero padding and the compaction
        # of the (possibly strided) input lane blocks into one matmul per dh.
        in_lanes = (np.arange(W)[:, None] * lane_stride
                    + np.arange(Cin)[None, :]).reshape(-1)
        bds = np.zeros((3, L_act, L_out), np.float32)
        for dh in range(3):
            small = sum(np.kron(np.eye(W, k=1 - dw, dtype=np.float32),
                                wnp[:, :, dh, dw].T)
                        for dw in range(3))                # (W*Cin, W*Cout)
            bds[dh, in_lanes, :] = small
        bias = np.tile(bnp.reshape(1, Cout), (1, W))       # lanes (w, c), c minor

        operands += [jnp.asarray(masks), jnp.asarray(bds), jnp.asarray(bias)]
        conv_meta.append(dict(rs=rs, L_out=L_out, cout=Cout))

        # bookkeeping after conv + 2x2 max pool
        Cin = Cout
        lane_stride = 2 * Cout
        rs *= 2
        H, W = H // 2, W // 2
        L_act = L_out

    # --- AdaptiveMaxPool2d(cls_input_res): divisible case only ---
    adapt = None
    if H != cls_input_res or W != cls_input_res:
        if (H < cls_input_res or W < cls_input_res
                or H % cls_input_res != 0 or W % cls_input_res != 0):
            # TODO(synk): general (non-divisible / upsampling) AdaptiveMaxPool2d windows
            raise NotImplementedError("non-divisible AdaptiveMaxPool2d")
        kh, kw = H // cls_input_res, W // cls_input_res
        adapt = dict(kh=kh, kw=kw, rs=rs, lane_stride=lane_stride, L=L_act)
        lane_stride *= kw
        rs *= kh
        H, W = cls_input_res, cls_input_res

    # --- classifier: flatten (NCHW order) + Linear stack ---
    R = cls_input_res
    C_last = Cin
    linears = params["cls"]["linears"]
    w_fc1 = np.asarray(linears[0][0], np.float32)          # (C*R*R, F1), torch flatten order
    b_fc1 = np.asarray(linears[0][1], np.float32).reshape(1, -1)
    F1 = int(w_fc1.shape[1])

    # One-hot selector picking row (n, j) out of the stacked [Z_0; ...; Z_{R-1}].
    sel = np.zeros((N, R * M), np.float32)
    for n in range(N):
        for j in range(R):
            sel[n, j * M + n * H0 + j * rs] = 1.0

    # fc1 weight slabs: rows moved from torch's (c, h, w) flatten order to the
    # kernel's (row j, lane = w*lane_stride + c) layout; unused lanes stay 0.
    w1e = np.zeros((R, L_act, F1), np.float32)
    for j in range(R):
        for wf in range(R):
            for c in range(C_last):
                w1e[j, wf * lane_stride + c, :] = w_fc1[c * R * R + j * R + wf, :]

    operands += [jnp.asarray(sel), jnp.asarray(w1e), jnp.asarray(b_fc1)]

    for (w, b) in linears[1:]:
        operands += [jnp.asarray(w, jnp.float32),
                     jnp.reshape(jnp.asarray(b, jnp.float32), (1, -1))]
    wfin, bfin = params["cls"]["final"]
    operands += [jnp.asarray(wfin, jnp.float32),
                 jnp.reshape(jnp.asarray(bfin, jnp.float32), (1, -1))]

    cfg = dict(n_conv=len(params["convs"]), conv_meta=conv_meta, adapt=adapt,
               M=M, cls_res=R, n_hidden_fc=len(linears),
               class_count=int(wfin.shape[1]),
               batch=N, in_ch=C0, in_h=H0, in_w=W0)
    return {"cfg": cfg, "operands": operands}


def complexity_classifier_forward(x_nchw, kparams, training=False):
    cfg = kparams["cfg"]
    N, C, H, W = x_nchw.shape
    assert (N, C, H, W) == (cfg["batch"], cfg["in_ch"], cfg["in_h"], cfg["in_w"])
    # Boundary layout prep only: NCHW -> rows=(n,h), lanes=(w,c).
    act0 = jnp.transpose(x_nchw, (0, 2, 3, 1)).reshape(N * H, W * C).astype(jnp.float32)
    operands = [act0] + list(kparams["operands"])

    kernel = _make_fused_kernel(cfg, training)
    vmem = pl.BlockSpec(memory_space=pltpu.MemorySpace.VMEM)
    return pl.pallas_call(
        kernel,
        out_shape=jax.ShapeDtypeStruct((N, cfg["class_count"]), jnp.float32),
        in_specs=[vmem] * len(operands),
        out_specs=pl.BlockSpec(memory_space=pltpu.MemorySpace.VMEM),
    )(*operands)


# --------------------------------------------------------------------------
# Deterministic synthetic parameters + pure-JAX reference
# --------------------------------------------------------------------------

def init_params(key, input_ch, inter_ch, cls_input_res, class_count, fc_chs):
    params = {"convs": [], "cls": {"linears": [], "final": None}}
    chs = [input_ch] + list(inter_ch)
    keys = iter(jax.random.split(key, 4 * (len(chs) + len(fc_chs) + 2)))
    for cin, cout in zip(chs[:-1], chs[1:]):
        w = jax.random.normal(next(keys), (cout, cin, 3, 3), jnp.float32) / jnp.sqrt(9.0 * cin)
        b = 0.01 * jax.random.normal(next(keys), (cout,), jnp.float32)
        params["convs"].append((w, b))
    dims = [chs[-1] * cls_input_res * cls_input_res] + list(fc_chs)
    for fin, fout in zip(dims[:-1], dims[1:]):
        w = jax.random.normal(next(keys), (fin, fout), jnp.float32) / jnp.sqrt(float(fin))
        b = 0.01 * jax.random.normal(next(keys), (1, fout), jnp.float32)
        params["cls"]["linears"].append((w, b))
    wf = jax.random.normal(next(keys), (dims[-1], class_count), jnp.float32) / jnp.sqrt(float(dims[-1]))
    bf = 0.01 * jax.random.normal(next(keys), (1, class_count), jnp.float32)
    params["cls"]["final"] = (wf, bf)
    return params


def reference_forward(x_nchw, params, cls_input_res, training=False):
    hp = lax.Precision.HIGHEST
    x = x_nchw
    for (w, b) in params["convs"]:
        y = lax.conv_general_dilated(
            x, w, (1, 1), ((1, 1), (1, 1)),
            dimension_numbers=("NCHW", "OIHW", "NCHW"),
            precision=hp) + b[None, :, None, None]
        y = jnp.maximum(y, 0.0)
        x = lax.reduce_window(y, -jnp.inf, lax.max, (1, 1, 2, 2), (1, 1, 2, 2), "VALID")
    N, C, H, W = x.shape
    if H != cls_input_res:
        k = H // cls_input_res
        x = lax.reduce_window(x, -jnp.inf, lax.max, (1, 1, k, k), (1, 1, k, k), "VALID")
    h = x.reshape(N, -1)
    for (w, b) in params["cls"]["linears"]:
        h = jnp.maximum(jnp.dot(h, w, precision=hp) + b, 0.0)
    wf, bf = params["cls"]["final"]
    logits = jnp.dot(h, wf, precision=hp) + bf
    return jax.nn.log_softmax(logits, -1) if training else jax.nn.softmax(logits, -1)


# --------------------------------------------------------------------------

if __name__ == "__main__":
    key = jax.random.PRNGKey(0)
    kx, kp = jax.random.split(key)

    # Module config: extractor(input_ch=4, inter_ch=[8,16]);
    # classifier(input_ch=16, input_res=4, class_count=3, fc_chs=[32])
    x = jax.random.normal(kx, (2, 4, 16, 16), jnp.float32)            # NCHW like PyTorch
    params = init_params(kp, input_ch=4, inter_ch=[8, 16],
                         cls_input_res=4, class_count=3, fc_chs=[32])
    kparams = prepare_kernel_params(params, x.shape, cls_input_res=4)

    out = complexity_classifier_forward(x, kparams, training=False)
    out = jax.block_until_ready(out)

    ref = reference_forward(x, params, cls_input_res=4, training=False)
    assert out.shape == (2, 3), out.shape
    assert jnp.allclose(out, ref, atol=1e-5, rtol=1e-5), (out, ref)
    assert jnp.allclose(jnp.sum(out, axis=-1), 1.0, atol=1e-5)

    print("KERNEL_OK")
</pallas_src>

<mosaic_0001>
module attributes {stable_mosaic.version = 11 : i64} {
  func.func @kernel(%arg0: memref<32x64xf32, #tpu.memory_space<vmem>>, %arg1: memref<2x32x1xf32, #tpu.memory_space<vmem>>, %arg2: memref<3x64x128xf32, #tpu.memory_space<vmem>>, %arg3: memref<1x128xf32, #tpu.memory_space<vmem>>, %arg4: memref<2x32x1xf32, #tpu.memory_space<vmem>>, %arg5: memref<3x128x128xf32, #tpu.memory_space<vmem>>, %arg6: memref<1x128xf32, #tpu.memory_space<vmem>>, %arg7: memref<2x128xf32, #tpu.memory_space<vmem>>, %arg8: memref<4x128x32xf32, #tpu.memory_space<vmem>>, %arg9: memref<1x32xf32, #tpu.memory_space<vmem>>, %arg10: memref<32x3xf32, #tpu.memory_space<vmem>>, %arg11: memref<1x3xf32, #tpu.memory_space<vmem>>, %arg12: memref<2x3xf32, #tpu.memory_space<vmem>>) attributes {dimension_semantics = [], scalar_prefetch = 0 : i64, scratch_operands = 0 : i64, tpu.core_type = #tpu.core_type<tc>} {
    %c0 = arith.constant 0 : index
    %c0_0 = arith.constant 0 : index
    %0 = vector.load %arg0[%c0, %c0_0] : memref<32x64xf32, #tpu.memory_space<vmem>>, vector<32x64xf32>
    %c1_i32 = arith.constant 1 : i32
    %1 = tpu.dynamic_rotate %0 by %c1_i32 dim 0 : vector<32x64xf32>, i32 -> vector<32x64xf32>
    %c0_1 = arith.constant 0 : index
    %c0_2 = arith.constant 0 : index
    %c0_3 = arith.constant 0 : index
    %2 = vector.load %arg1[%c0_1, %c0_2, %c0_3] : memref<2x32x1xf32, #tpu.memory_space<vmem>>, vector<1x32x1xf32>
    %3 = vector.shape_cast %2 : vector<1x32x1xf32> to vector<32x1xf32>
    %4 = vector.broadcast %3 : vector<32x1xf32> to vector<32x64xf32>
    %5 = arith.mulf %1, %4 : vector<32x64xf32>
    %c31_i32 = arith.constant 31 : i32
    %6 = tpu.dynamic_rotate %0 by %c31_i32 dim 0 : vector<32x64xf32>, i32 -> vector<32x64xf32>
    %c1 = arith.constant 1 : index
    %c0_4 = arith.constant 0 : index
    %c0_5 = arith.constant 0 : index
    %7 = vector.load %arg1[%c1, %c0_4, %c0_5] : memref<2x32x1xf32, #tpu.memory_space<vmem>>, vector<1x32x1xf32>
    %8 = vector.shape_cast %7 : vector<1x32x1xf32> to vector<32x1xf32>
    %9 = vector.broadcast %8 : vector<32x1xf32> to vector<32x64xf32>
    %10 = arith.mulf %6, %9 : vector<32x64xf32>
    %c1_6 = arith.constant 1 : index
    %c0_7 = arith.constant 0 : index
    %c0_8 = arith.constant 0 : index
    %11 = vector.load %arg2[%c1_6, %c0_7, %c0_8] : memref<3x64x128xf32, #tpu.memory_space<vmem>>, vector<1x64x128xf32>
    %12 = vector.shape_cast %11 : vector<1x64x128xf32> to vector<64x128xf32>
    %cst = arith.constant dense<0.000000e+00> : vector<32x128xf32>
    %13 = tpu.matmul %0, %12, %cst {dimension_numbers = #tpu.dot_dimension_numbers<[1], [0], [0], [1], [0, 0, 1, 1], [], []>} : vector<32x64xf32>, vector<64x128xf32>, vector<32x128xf32> -> vector<32x128xf32>
    %c0_9 = arith.constant 0 : index
    %c0_10 = arith.constant 0 : index
    %c0_11 = arith.constant 0 : index
    %14 = vector.load %arg2[%c0_9, %c0_10, %c0_11] : memref<3x64x128xf32, #tpu.memory_space<vmem>>, vector<1x64x128xf32>
    %15 = vector.shape_cast %14 : vector<1x64x128xf32> to vector<64x128xf32>
    %cst_12 = arith.constant dense<0.000000e+00> : vector<32x128xf32>
    %16 = tpu.matmul %5, %15, %cst_12 {dimension_numbers = #tpu.dot_dimension_numbers<[1], [0], [0], [1], [0, 0, 1, 1], [], []>} : vector<32x64xf32>, vector<64x128xf32>, vector<32x128xf32> -> vector<32x128xf32>
    %17 = arith.addf %13, %16 : vector<32x128xf32>
    %c2 = arith.constant 2 : index
    %c0_13 = arith.constant 0 : index
    %c0_14 = arith.constant 0 : index
    %18 = vector.load %arg2[%c2, %c0_13, %c0_14] : memref<3x64x128xf32, #tpu.memory_space<vmem>>, vector<1x64x128xf32>
    %19 = vector.shape_cast %18 : vector<1x64x128xf32> to vector<64x128xf32>
    %cst_15 = arith.constant dense<0.000000e+00> : vector<32x128xf32>
    %20 = tpu.matmul %10, %19, %cst_15 {dimension_numbers = #tpu.dot_dimension_numbers<[1], [0], [0], [1], [0, 0, 1, 1], [], []>} : vector<32x64xf32>, vector<64x128xf32>, vector<32x128xf32> -> vector<32x128xf32>
    %21 = arith.addf %17, %20 : vector<32x128xf32>
    %c120_i32 = arith.constant 120 : i32
    %22 = tpu.dynamic_rotate %21 by %c120_i32 dim 1 : vector<32x128xf32>, i32 -> vector<32x128xf32>
    %23 = arith.maximumf %21, %22 : vector<32x128xf32>
    %c31_i32_16 = arith.constant 31 : i32
    %24 = tpu.dynamic_rotate %23 by %c31_i32_16 dim 0 : vector<32x128xf32>, i32 -> vector<32x128xf32>
    %25 = arith.maximumf %23, %24 : vector<32x128xf32>
    %c0_17 = arith.constant 0 : index
    %c0_18 = arith.constant 0 : index
    %26 = vector.load %arg3[%c0_17, %c0_18] : memref<1x128xf32, #tpu.memory_space<vmem>>, vector<1x128xf32>
    %27 = vector.broadcast %26 : vector<1x128xf32> to vector<32x128xf32>
    %28 = arith.addf %25, %27 : vector<32x128xf32>
    %cst_19 = arith.constant 0.000000e+00 : f32
    %29 = vector.broadcast %cst_19 : f32 to vector<32x128xf32>
    %30 = arith.maximumf %28, %29 : vector<32x128xf32>
    %c2_i32 = arith.constant 2 : i32
    %31 = tpu.dynamic_rotate %30 by %c2_i32 dim 0 : vector<32x128xf32>, i32 -> vector<32x128xf32>
    %c0_20 = arith.constant 0 : index
    %c0_21 = arith.constant 0 : index
    %c0_22 = arith.constant 0 : index
    %32 = vector.load %arg4[%c0_20, %c0_21, %c0_22] : memref<2x32x1xf32, #tpu.memory_space<vmem>>, vector<1x32x1xf32>
    %33 = vector.shape_cast %32 : vector<1x32x1xf32> to vector<32x1xf32>
    %34 = vector.broadcast %33 : vector<32x1xf32> to vector<32x128xf32>
    %35 = arith.mulf %31, %34 : vector<32x128xf32>
    %c30_i32 = arith.constant 30 : i32
    %36 = tpu.dynamic_rotate %30 by %c30_i32 dim 0 : vector<32x128xf32>, i32 -> vector<32x128xf32>
    %c1_23 = arith.constant 1 : index
    %c0_24 = arith.constant 0 : index
    %c0_25 = arith.constant 0 : index
    %37 = vector.load %arg4[%c1_23, %c0_24, %c0_25] : memref<2x32x1xf32, #tpu.memory_space<vmem>>, vector<1x32x1xf32>
    %38 = vector.shape_cast %37 : vector<1x32x1xf32> to vector<32x1xf32>
    %39 = vector.broadcast %38 : vector<32x1xf32> to vector<32x128xf32>
    %40 = arith.mulf %36, %39 : vector<32x128xf32>
    %c1_26 = arith.constant 1 : index
    %c0_27 = arith.constant 0 : index
    %c0_28 = arith.constant 0 : index
    %41 = vector.load %arg5[%c1_26, %c0_27, %c0_28] : memref<3x128x128xf32, #tpu.memory_space<vmem>>, vector<1x128x128xf32>
    %42 = vector.shape_cast %41 : vector<1x128x128xf32> to vector<128x128xf32>
    %cst_29 = arith.constant dense<0.000000e+00> : vector<32x128xf32>
    %43 = tpu.matmul %30, %42, %cst_29 {dimension_numbers = #tpu.dot_dimension_numbers<[1], [0], [0], [1], [0, 0, 1, 1], [], []>} : vector<32x128xf32>, vector<128x128xf32>, vector<32x128xf32> -> vector<32x128xf32>
    %c0_30 = arith.constant 0 : index
    %c0_31 = arith.constant 0 : index
    %c0_32 = arith.constant 0 : index
    %44 = vector.load %arg5[%c0_30, %c0_31, %c0_32] : memref<3x128x128xf32, #tpu.memory_space<vmem>>, vector<1x128x128xf32>
    %45 = vector.shape_cast %44 : vector<1x128x128xf32> to vector<128x128xf32>
    %cst_33 = arith.constant dense<0.000000e+00> : vector<32x128xf32>
    %46 = tpu.matmul %35, %45, %cst_33 {dimension_numbers = #tpu.dot_dimension_numbers<[1], [0], [0], [1], [0, 0, 1, 1], [], []>} : vector<32x128xf32>, vector<128x128xf32>, vector<32x128xf32> -> vector<32x128xf32>
    %47 = arith.addf %43, %46 : vector<32x128xf32>
    %c2_34 = arith.constant 2 : index
    %c0_35 = arith.constant 0 : index
    %c0_36 = arith.constant 0 : index
    %48 = vector.load %arg5[%c2_34, %c0_35, %c0_36] : memref<3x128x128xf32, #tpu.memory_space<vmem>>, vector<1x128x128xf32>
    %49 = vector.shape_cast %48 : vector<1x128x128xf32> to vector<128x128xf32>
    %cst_37 = arith.constant dense<0.000000e+00> : vector<32x128xf32>
    %50 = tpu.matmul %40, %49, %cst_37 {dimension_numbers = #tpu.dot_dimension_numbers<[1], [0], [0], [1], [0, 0, 1, 1], [], []>} : vector<32x128xf32>, vector<128x128xf32>, vector<32x128xf32> -> vector<32x128xf32>
    %51 = arith.addf %47, %50 : vector<32x128xf32>
    %c112_i32 = arith.constant 112 : i32
    %52 = tpu.dynamic_rotate %51 by %c112_i32 dim 1 : vector<32x128xf32>, i32 -> vector<32x128xf32>
    %53 = arith.maximumf %51, %52 : vector<32x128xf32>
    %c30_i32_38 = arith.constant 30 : i32
    %54 = tpu.dynamic_rotate %53 by %c30_i32_38 dim 0 : vector<32x128xf32>, i32 -> vector<32x128xf32>
    %55 = arith.maximumf %53, %54 : vector<32x128xf32>
    %c0_39 = arith.constant 0 : index
    %c0_40 = arith.constant 0 : index
    %56 = vector.load %arg6[%c0_39, %c0_40] : memref<1x128xf32, #tpu.memory_space<vmem>>, vector<1x128xf32>
    %57 = vector.broadcast %56 : vector<1x128xf32> to vector<32x128xf32>
    %58 = arith.addf %55, %57 : vector<32x128xf32>
    %cst_41 = arith.constant 0.000000e+00 : f32
    %59 = vector.broadcast %cst_41 : f32 to vector<32x128xf32>
    %60 = arith.maximumf %58, %59 : vector<32x128xf32>
    %c0_42 = arith.constant 0 : index
    %c0_43 = arith.constant 0 : index
    %c0_44 = arith.constant 0 : index
    %61 = vector.load %arg8[%c0_42, %c0_43, %c0_44] : memref<4x128x32xf32, #tpu.memory_space<vmem>>, vector<1x128x32xf32>
    %62 = vector.shape_cast %61 : vector<1x128x32xf32> to vector<128x32xf32>
    %cst_45 = arith.constant dense<0.000000e+00> : vector<32x32xf32>
    %63 = tpu.matmul %60, %62, %cst_45 {dimension_numbers = #tpu.dot_dimension_numbers<[1], [0], [0], [1], [0, 0, 1, 1], [], []>} : vector<32x128xf32>, vector<128x32xf32>, vector<32x32xf32> -> vector<32x32xf32>
    %c1_46 = arith.constant 1 : index
    %c0_47 = arith.constant 0 : index
    %c0_48 = arith.constant 0 : index
    %64 = vector.load %arg8[%c1_46, %c0_47, %c0_48] : memref<4x128x32xf32, #tpu.memory_space<vmem>>, vector<1x128x32xf32>
    %65 = vector.shape_cast %64 : vector<1x128x32xf32> to vector<128x32xf32>
    %cst_49 = arith.constant dense<0.000000e+00> : vector<32x32xf32>
    %66 = tpu.matmul %60, %65, %cst_49 {dimension_numbers = #tpu.dot_dimension_numbers<[1], [0], [0], [1], [0, 0, 1, 1], [], []>} : vector<32x128xf32>, vector<128x32xf32>, vector<32x32xf32> -> vector<32x32xf32>
    %c2_50 = arith.constant 2 : index
    %c0_51 = arith.constant 0 : index
    %c0_52 = arith.constant 0 : index
    %67 = vector.load %arg8[%c2_50, %c0_51, %c0_52] : memref<4x128x32xf32, #tpu.memory_space<vmem>>, vector<1x128x32xf32>
    %68 = vector.shape_cast %67 : vector<1x128x32xf32> to vector<128x32xf32>
    %cst_53 = arith.constant dense<0.000000e+00> : vector<32x32xf32>
    %69 = tpu.matmul %60, %68, %cst_53 {dimension_numbers = #tpu.dot_dimension_numbers<[1], [0], [0], [1], [0, 0, 1, 1], [], []>} : vector<32x128xf32>, vector<128x32xf32>, vector<32x32xf32> -> vector<32x32xf32>
    %c3 = arith.constant 3 : index
    %c0_54 = arith.constant 0 : index
    %c0_55 = arith.constant 0 : index
    %70 = vector.load %arg8[%c3, %c0_54, %c0_55] : memref<4x128x32xf32, #tpu.memory_space<vmem>>, vector<1x128x32xf32>
    %71 = vector.shape_cast %70 : vector<1x128x32xf32> to vector<128x32xf32>
    %cst_56 = arith.constant dense<0.000000e+00> : vector<32x32xf32>
    %72 = tpu.matmul %60, %71, %cst_56 {dimension_numbers = #tpu.dot_dimension_numbers<[1], [0], [0], [1], [0, 0, 1, 1], [], []>} : vector<32x128xf32>, vector<128x32xf32>, vector<32x32xf32> -> vector<32x32xf32>
    %73 = tpu.concatenate %63, %66, %69, %72 in 0 : vector<32x32xf32>, vector<32x32xf32>, vector<32x32xf32>, vector<32x32xf32> -> vector<128x32xf32>
    %c0_57 = arith.constant 0 : index
    %c0_58 = arith.constant 0 : index
    %74 = vector.load %arg7[%c0_57, %c0_58] : memref<2x128xf32, #tpu.memory_space<vmem>>, vector<2x128xf32>
    %cst_59 = arith.constant dense<0.000000e+00> : vector<2x32xf32>
    %75 = tpu.matmul %74, %73, %cst_59 {dimension_numbers = #tpu.dot_dimension_numbers<[1], [0], [0], [1], [0, 0, 1, 1], [], []>} : vector<2x128xf32>, vector<128x32xf32>, vector<2x32xf32> -> vector<2x32xf32>
    %c0_60 = arith.constant 0 : index
    %c0_61 = arith.constant 0 : index
    %76 = vector.load %arg9[%c0_60, %c0_61] : memref<1x32xf32, #tpu.memory_space<vmem>>, vector<1x32xf32>
    %77 = vector.broadcast %76 : vector<1x32xf32> to vector<2x32xf32>
    %78 = arith.addf %75, %77 : vector<2x32xf32>
    %cst_62 = arith.constant 0.000000e+00 : f32
    %79 = vector.broadcast %cst_62 : f32 to vector<2x32xf32>
    %80 = arith.maximumf %78, %79 : vector<2x32xf32>
    %c0_63 = arith.constant 0 : index
    %c0_64 = arith.constant 0 : index
    %81 = vector.load %arg10[%c0_63, %c0_64] : memref<32x3xf32, #tpu.memory_space<vmem>>, vector<32x3xf32>
    %cst_65 = arith.constant dense<0.000000e+00> : vector<2x3xf32>
    %82 = tpu.matmul %80, %81, %cst_65 {dimension_numbers = #tpu.dot_dimension_numbers<[1], [0], [0], [1], [0, 0, 1, 1], [], []>} : vector<2x32xf32>, vector<32x3xf32>, vector<2x3xf32> -> vector<2x3xf32>
    %c0_66 = arith.constant 0 : index
    %c0_67 = arith.constant 0 : index
    %83 = vector.load %arg11[%c0_66, %c0_67] : memref<1x3xf32, #tpu.memory_space<vmem>>, vector<1x3xf32>
    %84 = vector.broadcast %83 : vector<1x3xf32> to vector<2x3xf32>
    %85 = arith.addf %82, %84 : vector<2x3xf32>
    %cst_68 = arith.constant dense<0xFF800000> : vector<2xf32>
    %86 = vector.multi_reduction <maximumf>, %85, %cst_68 [1] : vector<2x3xf32> to vector<2xf32>
    %87 = vector.shape_cast %86 : vector<2xf32> to vector<2x1xf32>
    %88 = vector.broadcast %87 : vector<2x1xf32> to vector<2x3xf32>
    %89 = arith.subf %85, %88 : vector<2x3xf32>
    %90 = math.exp %89 : vector<2x3xf32>
    %cst_69 = arith.constant dense<0.000000e+00> : vector<2xf32>
    %91 = vector.multi_reduction <add>, %90, %cst_69 [1] : vector<2x3xf32> to vector<2xf32>
    %92 = vector.shape_cast %91 : vector<2xf32> to vector<2x1xf32>
    %93 = vector.broadcast %92 : vector<2x1xf32> to vector<2x3xf32>
    %94 = arith.divf %90, %93 : vector<2x3xf32>
    %c0_70 = arith.constant 0 : index
    %c0_71 = arith.constant 0 : index
    %95 = vector.load %arg12[%c0_70, %c0_71] : memref<2x3xf32, #tpu.memory_space<vmem>>, vector<2x3xf32>
    tpu.vector_store %arg12[%c0_70, %c0_71], %94 {strides = array<i32>} : memref<2x3xf32, #tpu.memory_space<vmem>>, vector<2x3xf32>,
    return
  }
}

</mosaic_0001>

<llo_original>
// kernel: tpu_custom_call.1
$region0: #{tpu_custom_call.1}
  #allocation0 [shape = 'u32[]', space=smem, size = 0x4, offset = 0x4, fixed_abs, tag = 'smem constant byte address 0x4 - core index']
  #allocation1 [shape = 'u32[72,128]{1,0:T(1,128)}', space=vmem, size = 0x9000, scoped, tag = 'internal scratch']
  %s0 = inlined_call_operand.vmem [shape: f32[32,64], index: 0, kind: input, shape index: {}]
  %s1 = inlined_call_operand.vmem [shape: f32[2,32,1], index: 1, kind: input, shape index: {}]
  %s2 = inlined_call_operand.vmem [shape: f32[3,64,128], index: 2, kind: input, shape index: {}]
  %s3 = inlined_call_operand.vmem [shape: f32[1,128], index: 3, kind: input, shape index: {}]
  %s4 = inlined_call_operand.vmem [shape: f32[2,32,1], index: 4, kind: input, shape index: {}]
  %s5 = inlined_call_operand.vmem [shape: f32[3,128,128], index: 5, kind: input, shape index: {}]
  %s6 = inlined_call_operand.vmem [shape: f32[1,128], index: 6, kind: input, shape index: {}]
  %s7 = inlined_call_operand.vmem [shape: f32[2,128], index: 7, kind: input, shape index: {}]
  %s8 = inlined_call_operand.vmem [shape: f32[4,128,32], index: 8, kind: input, shape index: {}]
  %s9 = inlined_call_operand.vmem [shape: f32[1,32], index: 9, kind: input, shape index: {}]
  %s10 = inlined_call_operand.vmem [shape: f32[32,3], index: 10, kind: input, shape index: {}]
  %s11 = inlined_call_operand.vmem [shape: f32[1,3], index: 11, kind: input, shape index: {}]
  %s12 = inlined_call_operand.hbm [shape: f32[2,3], index: 12, kind: output, shape index: {}]
  %s13 = sld [smem:[#allocation0]]
  $region58: #{tpu_custom_call.1} parent=0
    _
  %s15 = ssub.s32 1, %s13
  %s16 = scalar_select 0, %s15, %s13
  $region1: #{tpu_custom_call.1} parent=0
    #allocation2 [shape = 'u8[1024]{0}', space=vmem, size = 0x400, scoped, tag = 'output window, operand 0, single buffered']
    #allocation3 [shape = 's32[1]{0}', space=sflag, size = 0x4, scoped, tag = 'scoped memory for tpu_custom_call.1']
    %17 = vsyncpa [#allocation3], 0
    // Predicated region
    $region2: #{tpu_custom_call.1} parent=1 // pred_check
      _
    $region3: #{tpu_custom_call.1} parent=1 // pred_check_branch
      %19 = sbr.rel (0) target = $region5
    $region4: #{tpu_custom_call.1} parent=1 // pred_region
      _
    $region5: #{tpu_custom_call.1} parent=1 // pred_fallthru
      _
    // Predicated region
    $region6: #{tpu_custom_call.1} parent=1 // pred_check
      _
    $region7: #{tpu_custom_call.1} parent=1 // pred_check_branch
      %21 = sbr.rel (0) target = $region9
    $region8: #{tpu_custom_call.1} parent=1 // pred_region
      _
    $region9: #{tpu_custom_call.1} parent=1 // pred_fallthru
      _
    // Predicated region
    $region10: #{tpu_custom_call.1} parent=1 // pred_check
      _
    $region11: #{tpu_custom_call.1} parent=1 // pred_check_branch
      %23 = sbr.rel (0) target = $region13
    $region12: #{tpu_custom_call.1} parent=1 // pred_region
      _
    $region13: #{tpu_custom_call.1} parent=1 // pred_fallthru
      _
    // Predicated region
    $region14: #{tpu_custom_call.1} parent=1 // pred_check
      _
    $region15: #{tpu_custom_call.1} parent=1 // pred_check_branch
      %25 = sbr.rel (0) target = $region17
    $region16: #{tpu_custom_call.1} parent=1 // pred_region
      _
    $region17: #{tpu_custom_call.1} parent=1 // pred_fallthru
      _
    // Predicated region
    $region18: #{tpu_custom_call.1} parent=1 // pred_check
      _
    $region19: #{tpu_custom_call.1} parent=1 // pred_check_branch
      %27 = sbr.rel (0) target = $region21
    $region20: #{tpu_custom_call.1} parent=1 // pred_region
      _
    $region21: #{tpu_custom_call.1} parent=1 // pred_fallthru
      _
    // Predicated region
    $region22: #{tpu_custom_call.1} parent=1 // pred_check
      _
    $region23: #{tpu_custom_call.1} parent=1 // pred_check_branch
      %29 = sbr.rel (0) target = $region25
    $region24: #{tpu_custom_call.1} parent=1 // pred_region
      _
    $region25: #{tpu_custom_call.1} parent=1 // pred_fallthru
      _
    // Predicated region
    $region26: #{tpu_custom_call.1} parent=1 // pred_check
      _
    $region27: #{tpu_custom_call.1} parent=1 // pred_check_branch
      %31 = sbr.rel (0) target = $region29
    $region28: #{tpu_custom_call.1} parent=1 // pred_region
      _
    $region29: #{tpu_custom_call.1} parent=1 // pred_fallthru
      _
    // Predicated region
    $region30: #{tpu_custom_call.1} parent=1 // pred_check
      _
    $region31: #{tpu_custom_call.1} parent=1 // pred_check_branch
      %33 = sbr.rel (0) target = $region33
    $region32: #{tpu_custom_call.1} parent=1 // pred_region
      _
    $region33: #{tpu_custom_call.1} parent=1 // pred_fallthru
      _
    // Predicated region
    $region34: #{tpu_custom_call.1} parent=1 // pred_check
      _
    $region35: #{tpu_custom_call.1} parent=1 // pred_check_branch
      %35 = sbr.rel (0) target = $region37
    $region36: #{tpu_custom_call.1} parent=1 // pred_region
      _
    $region37: #{tpu_custom_call.1} parent=1 // pred_fallthru
      _
    // Predicated region
    $region38: #{tpu_custom_call.1} parent=1 // pred_check
      _
    $region39: #{tpu_custom_call.1} parent=1 // pred_check_branch
      %37 = sbr.rel (0) target = $region41
    $region40: #{tpu_custom_call.1} parent=1 // pred_region
      _
    $region41: #{tpu_custom_call.1} parent=1 // pred_fallthru
      _
    // Predicated region
    $region42: #{tpu_custom_call.1} parent=1 // pred_check
      _
    $region43: #{tpu_custom_call.1} parent=1 // pred_check_branch
      %39 = sbr.rel (0) target = $region45
    $region44: #{tpu_custom_call.1} parent=1 // pred_region
      _
    $region45: #{tpu_custom_call.1} parent=1 // pred_fallthru
      _
    // Predicated region
    $region46: #{tpu_custom_call.1} parent=1 // pred_check
      _
    $region47: #{tpu_custom_call.1} parent=1 // pred_check_branch
      %41 = sbr.rel (0) target = $region49
    $region48: #{tpu_custom_call.1} parent=1 // pred_region
      _
    $region49: #{tpu_custom_call.1} parent=1 // pred_fallthru
      _
    %v42 = vld [vmem:[%s0] sm:$0xff]
    %v43 = vld [vmem:[%s0 + $0x8] sm:$0xff]
    %v44 = vld [vmem:[%s0 + $0x10] sm:$0xff]
    %v45 = vld [vmem:[%s0 + $0x18] sm:$0xff]
    %v46 = vrot.slane %v42, 7
    %v47 = vrot.slane %v43, 7
    %v48 = vrot.slane %v44, 7
    %v49 = vrot.slane %v45, 7
    %v50 = vlaneseq
    %v51 = vshrl.u32 %v50, 7
    %vm52 = vcmp.lt.s32.totalorder %v51, 1
    %v53 = vsel %vm52, %v48, %v49
    %v54 = vsel %vm52, %v47, %v48
    %v55 = vsel %vm52, %v46, %v47
    %v56 = vsel %vm52, %v49, %v46
    %v57 = vld [vmem:[%s1] sm:$0xff]
    %v58 = vld [vmem:[%s1 + $0x8] sm:$0xff]
    %v59 = vld [vmem:[%s1 + $0x10] sm:$0xff]
    %v60 = vld [vmem:[%s1 + $0x18] sm:$0xff]
    %62 = vset.pattern.permute.xlu0 0
    %63 = vperm.xlu0 %62, %v57
    %v64 = vpop.permute.xlu0 %63
    %67 = vset.pattern.permute.xlu0 0
    %68 = vperm.xlu0 %67, %v58
    %v69 = vpop.permute.xlu0 %68
    %72 = vset.pattern.permute.xlu0 0
    %73 = vperm.xlu0 %72, %v59
    %v74 = vpop.permute.xlu0 %73
    %77 = vset.pattern.permute.xlu0 0
    %78 = vperm.xlu0 %77, %v60
    %v79 = vpop.permute.xlu0 %78
    %v81 = vmul.f32 %v56, %v64
    %v82 = vmul.f32 %v55, %v69
    %v83 = vmul.f32 %v54, %v74
    %v84 = vmul.f32 %v53, %v79
    %v85 = vrot.slane %v42, 1
    %v86 = vrot.slane %v43, 1
    %v87 = vrot.slane %v44, 1
    %v88 = vrot.slane %v45, 1
    %vm89 = vcmp.lt.s32.totalorder %v51, 7
    %v90 = vsel %vm89, %v87, %v88
    %v91 = vsel %vm89, %v86, %v87
    %v92 = vsel %vm89, %v85, %v86
    %v93 = vsel %vm89, %v88, %v85
    %s94 = scalar_lea.vmem %s1, 32
    %v95 = vld [vmem:[%s94] sm:$0xff]
    %v96 = vld [vmem:[%s94 + $0x8] sm:$0xff]
    %v97 = vld [vmem:[%s94 + $0x10] sm:$0xff]
    %v98 = vld [vmem:[%s94 + $0x18] sm:$0xff]
    %100 = vset.pattern.permute.xlu0 0
    %101 = vperm.xlu0 %100, %v95
    %v102 = vpop.permute.xlu0 %101
    %105 = vset.pattern.permute.xlu0 0
    %106 = vperm.xlu0 %105, %v96
    %v107 = vpop.permute.xlu0 %106
    %110 = vset.pattern.permute.xlu0 0
    %111 = vperm.xlu0 %110, %v97
    %v112 = vpop.permute.xlu0 %111
    %115 = vset.pattern.permute.xlu0 0
    %116 = vperm.xlu0 %115, %v98
    %v117 = vpop.permute.xlu0 %116
    %v119 = vmul.f32 %v92, %v102
    %v120 = vmul.f32 %v91, %v107
    %v121 = vmul.f32 %v90, %v112
    %v122 = vmul.f32 %v93, %v117
    %s123 = scalar_lea.vmem %s2, 64
    %v124 = vld [vmem:[%s123] sm:$0xff]
    %v125 = vld [vmem:[%s123 + $0x8] sm:$0xff]
    %v126 = vld [vmem:[%s123 + $0x10] sm:$0xff]
    %v127 = vld [vmem:[%s123 + $0x18] sm:$0xff]
    %v128 = vld [vmem:[%s123 + $0x20] sm:$0xff]
    %v129 = vld [vmem:[%s123 + $0x28] sm:$0xff]
    %v130 = vld [vmem:[%s123 + $0x30] sm:$0xff]
    %v131 = vld [vmem:[%s123 + $0x38] sm:$0xff]
    %v132 = vld [vmem:[%s2] sm:$0xff]
    %v133 = vld [vmem:[%s2 + $0x8] sm:$0xff]
    %v134 = vld [vmem:[%s2 + $0x10] sm:$0xff]
    %v135 = vld [vmem:[%s2 + $0x18] sm:$0xff]
    %v136 = vld [vmem:[%s2 + $0x20] sm:$0xff]
    %v137 = vld [vmem:[%s2 + $0x28] sm:$0xff]
    %v138 = vld [vmem:[%s2 + $0x30] sm:$0xff]
    %v139 = vld [vmem:[%s2 + $0x38] sm:$0xff]
    %vm140 = vcmask 523264
    %v142 = vsel %vm140, %v81, 0
    %v145 = vsel %vm140, %v82, 0
    %v148 = vsel %vm140, %v83, 0
    %v151 = vsel %vm140, %v84, 0
    %153 = vmatpush.msra.mxu0 0.0
    %154 = vmatpush.msra.mxu0 0.0
    %155 = vmatpush.msra.mxu0 0.0
    %156 = vmatpush.msra.mxu0 0.0
    %157 = vmatpush.msra.mxu0 0.0
    %158 = vmatpush.msra.mxu0 0.0
    %159 = vmatpush.msra.mxu0 0.0
    %160 = vmatpush.msra.mxu0 0.0
    %161 = vmatpush.msra.mxu0 %v139
    %162 = vmatpush.msra.mxu0 %v138
    %163 = vmatpush.msra.mxu0 %v137
    %164 = vmatpush.msra.mxu0 %v136
    %165 = vmatpush.msra.mxu0 %v135
    %166 = vmatpush.msra.mxu0 %v134
    %167 = vmatpush.msra.mxu0 %v133
    %168 = vmatpush.msra.mxu0 %v132
    %169 = vmatmul.f32.gmra.mxu0 %v142
    %v170 = vpop.f32.mrf.mxu0
    %v171 = vadd.f32 0.0, %v170
    %172 = vmatmul.f32.gmra.mxu0 %v145
    %v173 = vpop.f32.mrf.mxu0
    %v174 = vadd.f32 0.0, %v173
    %175 = vmatmul.f32.gmra.mxu0 %v148
    %v176 = vpop.f32.mrf.mxu0
    %v177 = vadd.f32 0.0, %v176
    %178 = vmatmul.f32.gmra.mxu0 %v151
    %v179 = vpop.f32.mrf.mxu0
    %v180 = vadd.f32 0.0, %v179
    %181 = vdwg.mxu0
    %v183 = vsel %vm140, %v42, 0
    %v186 = vsel %vm140, %v43, 0
    %v189 = vsel %vm140, %v44, 0
    %v192 = vsel %vm140, %v45, 0
    %194 = vmatpush.msra.mxu0 0.0
    %195 = vmatpush.msra.mxu0 0.0
    %196 = vmatpush.msra.mxu0 0.0
    %197 = vmatpush.msra.mxu0 0.0
    %198 = vmatpush.msra.mxu0 0.0
    %199 = vmatpush.msra.mxu0 0.0
    %200 = vmatpush.msra.mxu0 0.0
    %201 = vmatpush.msra.mxu0 0.0
    %202 = vmatpush.msra.mxu0 %v131
    %203 = vmatpush.msra.mxu0 %v130
    %204 = vmatpush.msra.mxu0 %v129
    %205 = vmatpush.msra.mxu0 %v128
    %206 = vmatpush.msra.mxu0 %v127
    %207 = vmatpush.msra.mxu0 %v126
    %208 = vmatpush.msra.mxu0 %v125
    %209 = vmatpush.msra.mxu0 %v124
    %210 = vmatmul.f32.gmra.mxu0 %v183
    %v211 = vpop.f32.mrf.mxu0
    %v212 = vadd.f32 %v171, %v211
    %213 = vmatmul.f32.gmra.mxu0 %v186
    %v214 = vpop.f32.mrf.mxu0
    %v215 = vadd.f32 %v174, %v214
    %216 = vmatmul.f32.gmra.mxu0 %v189
    %v217 = vpop.f32.mrf.mxu0
    %v218 = vadd.f32 %v177, %v217
    %219 = vmatmul.f32.gmra.mxu0 %v192
    %v220 = vpop.f32.mrf.mxu0
    %v221 = vadd.f32 %v180, %v220
    %222 = vdwg.mxu0
    %s223 = scalar_lea.vmem %s2, 128
    %v224 = vld [vmem:[%s223] sm:$0xff]
    %v225 = vld [vmem:[%s223 + $0x8] sm:$0xff]
    %v226 = vld [vmem:[%s223 + $0x10] sm:$0xff]
    %v227 = vld [vmem:[%s223 + $0x18] sm:$0xff]
    %v228 = vld [vmem:[%s223 + $0x20] sm:$0xff]
    %v229 = vld [vmem:[%s223 + $0x28] sm:$0xff]
    %v230 = vld [vmem:[%s223 + $0x30] sm:$0xff]
    %v231 = vld [vmem:[%s223 + $0x38] sm:$0xff]
    %v233 = vsel %vm140, %v119, 0
    %v236 = vsel %vm140, %v120, 0
    %v239 = vsel %vm140, %v121, 0
    %v242 = vsel %vm140, %v122, 0
    %244 = vmatpush.msra.mxu0 0.0
    %245 = vmatpush.msra.mxu0 0.0
    %246 = vmatpush.msra.mxu0 0.0
    %247 = vmatpush.msra.mxu0 0.0
    %248 = vmatpush.msra.mxu0 0.0
    %249 = vmatpush.msra.mxu0 0.0
    %250 = vmatpush.msra.mxu0 0.0
    %251 = vmatpush.msra.mxu0 0.0
    %252 = vmatpush.msra.mxu0 %v231
    %253 = vmatpush.msra.mxu0 %v230
    %254 = vmatpush.msra.mxu0 %v229
    %255 = vmatpush.msra.mxu0 %v228
    %256 = vmatpush.msra.mxu0 %v227
    %257 = vmatpush.msra.mxu0 %v226
    %258 = vmatpush.msra.mxu0 %v225
    %259 = vmatpush.msra.mxu0 %v224
    %260 = vmatmul.f32.gmra.mxu0 %v233
    %v261 = vpop.f32.mrf.mxu0
    %v262 = vadd.f32 0.0, %v261
    %263 = vmatmul.f32.gmra.mxu0 %v236
    %v264 = vpop.f32.mrf.mxu0
    %v265 = vadd.f32 0.0, %v264
    %266 = vmatmul.f32.gmra.mxu0 %v239
    %v267 = vpop.f32.mrf.mxu0
    %v268 = vadd.f32 0.0, %v267
    %269 = vmatmul.f32.gmra.mxu0 %v242
    %v270 = vpop.f32.mrf.mxu0
    %v271 = vadd.f32 0.0, %v270
    %272 = vdwg.mxu0
    %v273 = vadd.f32 %v212, %v262
    %v274 = vadd.f32 %v215, %v265
    %v275 = vadd.f32 %v218, %v268
    %v276 = vadd.f32 %v221, %v271
    %277 = vrot.lane.b32.xlu0 %v273, 120
    %v278 = vpop.permute.xlu0 %277
    %279 = vrot.lane.b32.xlu0 %v274, 120
    %v280 = vpop.permute.xlu0 %279
    %281 = vrot.lane.b32.xlu0 %v275, 120
    %v282 = vpop.permute.xlu0 %281
    %283 = vrot.lane.b32.xlu0 %v276, 120
    %v284 = vpop.permute.xlu0 %283
    %v285 = vmax.f32 %v273, %v278
    %v286 = vmax.f32 %v274, %v280
    %v287 = vmax.f32 %v275, %v282
    %v288 = vmax.f32 %v276, %v284
    %v289 = vrot.slane %v285, 1
    %v290 = vrot.slane %v286, 1
    %v291 = vrot.slane %v287, 1
    %v292 = vrot.slane %v288, 1
    %v293 = vsel %vm89, %v291, %v292
    %v294 = vsel %vm89, %v290, %v291
    %v295 = vsel %vm89, %v289, %v290
    %v296 = vsel %vm89, %v292, %v289
    %v297 = vmax.f32 %v285, %v295
    %v298 = vmax.f32 %v286, %v294
    %v299 = vmax.f32 %v287, %v293
    %v300 = vmax.f32 %v288, %v296
    %v301 = vld [vmem:[%s3] sm:$0x1]
    %v303 = vperm.slane %v301, 0
    %v305 = vadd.f32 %v297, %v303
    %v306 = vadd.f32 %v298, %v303
    %v307 = vadd.f32 %v299, %v303
    %v308 = vadd.f32 %v300, %v303
    %v309 = vmax.f32 %v305, 0.0
    %v310 = vmax.f32 %v306, 0.0
    %v311 = vmax.f32 %v307, 0.0
    %v312 = vmax.f32 %v308, 0.0
    %v313 = vrot.slane %v309, 6
    %v314 = vrot.slane %v310, 6
    %v315 = vrot.slane %v311, 6
    %v316 = vrot.slane %v312, 6
    %vm317 = vcmp.lt.s32.totalorder %v51, 2
    %v318 = vsel %vm317, %v315, %v316
    %v319 = vsel %vm317, %v314, %v315
    %v320 = vsel %vm317, %v313, %v314
    %v321 = vsel %vm317, %v316, %v313
    %v322 = vld [vmem:[%s4] sm:$0xff]
    %v323 = vld [vmem:[%s4 + $0x8] sm:$0xff]
    %v324 = vld [vmem:[%s4 + $0x10] sm:$0xff]
    %v325 = vld [vmem:[%s4 + $0x18] sm:$0xff]
    %327 = vset.pattern.permute.xlu0 0
    %328 = vperm.xlu0 %327, %v322
    %v329 = vpop.permute.xlu0 %328
    %332 = vset.pattern.permute.xlu0 0
    %333 = vperm.xlu0 %332, %v323
    %v334 = vpop.permute.xlu0 %333
    %337 = vset.pattern.permute.xlu0 0
    %338 = vperm.xlu0 %337, %v324
    %v339 = vpop.permute.xlu0 %338
    %342 = vset.pattern.permute.xlu0 0
    %343 = vperm.xlu0 %342, %v325
    %v344 = vpop.permute.xlu0 %343
    %v346 = vmul.f32 %v321, %v329
    %v347 = vmul.f32 %v320, %v334
    %v348 = vmul.f32 %v319, %v339
    %v349 = vmul.f32 %v318, %v344
    %v350 = vrot.slane %v309, 2
    %v351 = vrot.slane %v310, 2
    %v352 = vrot.slane %v311, 2
    %v353 = vrot.slane %v312, 2
    %vm354 = vcmp.lt.s32.totalorder %v51, 6
    %v355 = vsel %vm354, %v352, %v353
    %v356 = vsel %vm354, %v351, %v352
    %v357 = vsel %vm354, %v350, %v351
    %v358 = vsel %vm354, %v353, %v350
    %s359 = scalar_lea.vmem %s4, 32
    %v360 = vld [vmem:[%s359] sm:$0xff]
    %v361 = vld [vmem:[%s359 + $0x8] sm:$0xff]
    %v362 = vld [vmem:[%s359 + $0x10] sm:$0xff]
    %v363 = vld [vmem:[%s359 + $0x18] sm:$0xff]
    %365 = vset.pattern.permute.xlu0 0
    %366 = vperm.xlu0 %365, %v360
    %v367 = vpop.permute.xlu0 %366
    %370 = vset.pattern.permute.xlu0 0
    %371 = vperm.xlu0 %370, %v361
    %v372 = vpop.permute.xlu0 %371
    %375 = vset.pattern.permute.xlu0 0
    %376 = vperm.xlu0 %375, %v362
    %v377 = vpop.permute.xlu0 %376
    %380 = vset.pattern.permute.xlu0 0
    %381 = vperm.xlu0 %380, %v363
    %v382 = vpop.permute.xlu0 %381
    %v384 = vmul.f32 %v357, %v367
    %v385 = vmul.f32 %v356, %v372
    %v386 = vmul.f32 %v355, %v377
    %v387 = vmul.f32 %v358, %v382
    %s388 = scalar_lea.vmem %s5, 128
    %v389 = vld [vmem:[%s388] sm:$0xff]
    %v390 = vld [vmem:[%s388 + $0x8] sm:$0xff]
    %v391 = vld [vmem:[%s388 + $0x10] sm:$0xff]
    %v392 = vld [vmem:[%s388 + $0x18] sm:$0xff]
    %v393 = vld [vmem:[%s388 + $0x20] sm:$0xff]
    %v394 = vld [vmem:[%s388 + $0x28] sm:$0xff]
    %v395 = vld [vmem:[%s388 + $0x30] sm:$0xff]
    %v396 = vld [vmem:[%s388 + $0x38] sm:$0xff]
    %v397 = vld [vmem:[%s388 + $0x40] sm:$0xff]
    %v398 = vld [vmem:[%s388 + $0x48] sm:$0xff]
    %v399 = vld [vmem:[%s388 + $0x50] sm:$0xff]
    %v400 = vld [vmem:[%s388 + $0x58] sm:$0xff]
    %v401 = vld [vmem:[%s388 + $0x60] sm:$0xff]
    %v402 = vld [vmem:[%s388 + $0x68] sm:$0xff]
    %v403 = vld [vmem:[%s388 + $0x70] sm:$0xff]
    %v404 = vld [vmem:[%s388 + $0x78] sm:$0xff]
    %v405 = vld [vmem:[%s5] sm:$0xff]
    %v406 = vld [vmem:[%s5 + $0x8] sm:$0xff]
    %v407 = vld [vmem:[%s5 + $0x10] sm:$0xff]
    %v408 = vld [vmem:[%s5 + $0x18] sm:$0xff]
    %v409 = vld [vmem:[%s5 + $0x20] sm:$0xff]
    %v410 = vld [vmem:[%s5 + $0x28] sm:$0xff]
    %v411 = vld [vmem:[%s5 + $0x30] sm:$0xff]
    %v412 = vld [vmem:[%s5 + $0x38] sm:$0xff]
    %v413 = vld [vmem:[%s5 + $0x40] sm:$0xff]
    %v414 = vld [vmem:[%s5 + $0x48] sm:$0xff]
    %v415 = vld [vmem:[%s5 + $0x50] sm:$0xff]
    %v416 = vld [vmem:[%s5 + $0x58] sm:$0xff]
    %v417 = vld [vmem:[%s5 + $0x60] sm:$0xff]
    %v418 = vld [vmem:[%s5 + $0x68] sm:$0xff]
    %v419 = vld [vmem:[%s5 + $0x70] sm:$0xff]
    %v420 = vld [vmem:[%s5 + $0x78] sm:$0xff]
    %421 = vmatpush.msra.mxu0 %v420
    %422 = vmatpush.msra.mxu0 %v419
    %423 = vmatpush.msra.mxu0 %v418
    %424 = vmatpush.msra.mxu0 %v417
    %425 = vmatpush.msra.mxu0 %v416
    %426 = vmatpush.msra.mxu0 %v415
    %427 = vmatpush.msra.mxu0 %v414
    %428 = vmatpush.msra.mxu0 %v413
    %429 = vmatpush.msra.mxu0 %v412
    %430 = vmatpush.msra.mxu0 %v411
    %431 = vmatpush.msra.mxu0 %v410
    %432 = vmatpush.msra.mxu0 %v409
    %433 = vmatpush.msra.mxu0 %v408
    %434 = vmatpush.msra.mxu0 %v407
    %435 = vmatpush.msra.mxu0 %v406
    %436 = vmatpush.msra.mxu0 %v405
    %437 = vmatmul.f32.gmra.mxu0 %v346
    %v438 = vpop.f32.mrf.mxu0
    %v439 = vadd.f32 0.0, %v438
    %440 = vmatmul.f32.gmra.mxu0 %v347
    %v441 = vpop.f32.mrf.mxu0
    %v442 = vadd.f32 0.0, %v441
    %443 = vmatmul.f32.gmra.mxu0 %v348
    %v444 = vpop.f32.mrf.mxu0
    %v445 = vadd.f32 0.0, %v444
    %446 = vmatmul.f32.gmra.mxu0 %v349
    %v447 = vpop.f32.mrf.mxu0
    %v448 = vadd.f32 0.0, %v447
    %449 = vdwg.mxu0
    %450 = vmatpush.msra.mxu0 %v404
    %451 = vmatpush.msra.mxu0 %v403
    %452 = vmatpush.msra.mxu0 %v402
    %453 = vmatpush.msra.mxu0 %v401
    %454 = vmatpush.msra.mxu0 %v400
    %455 = vmatpush.msra.mxu0 %v399
    %456 = vmatpush.msra.mxu0 %v398
    %457 = vmatpush.msra.mxu0 %v397
    %458 = vmatpush.msra.mxu0 %v396
    %459 = vmatpush.msra.mxu0 %v395
    %460 = vmatpush.msra.mxu0 %v394
    %461 = vmatpush.msra.mxu0 %v393
    %462 = vmatpush.msra.mxu0 %v392
    %463 = vmatpush.msra.mxu0 %v391
    %464 = vmatpush.msra.mxu0 %v390
    %465 = vmatpush.msra.mxu0 %v389
    %466 = vmatmul.f32.gmra.mxu0 %v309
    %v467 = vpop.f32.mrf.mxu0
    %v468 = vadd.f32 %v439, %v467
    %469 = vmatmul.f32.gmra.mxu0 %v310
    %v470 = vpop.f32.mrf.mxu0
    %v471 = vadd.f32 %v442, %v470
    %472 = vmatmul.f32.gmra.mxu0 %v311
    %v473 = vpop.f32.mrf.mxu0
    %v474 = vadd.f32 %v445, %v473
    %475 = vmatmul.f32.gmra.mxu0 %v312
    %v476 = vpop.f32.mrf.mxu0
    %v477 = vadd.f32 %v448, %v476
    %478 = vdwg.mxu0
    %s479 = scalar_lea.vmem %s5, 256
    %v480 = vld [vmem:[%s479] sm:$0xff]
    %v481 = vld [vmem:[%s479 + $0x8] sm:$0xff]
    %v482 = vld [vmem:[%s479 + $0x10] sm:$0xff]
    %v483 = vld [vmem:[%s479 + $0x18] sm:$0xff]
    %v484 = vld [vmem:[%s479 + $0x20] sm:$0xff]
    %v485 = vld [vmem:[%s479 + $0x28] sm:$0xff]
    %v486 = vld [vmem:[%s479 + $0x30] sm:$0xff]
    %v487 = vld [vmem:[%s479 + $0x38] sm:$0xff]
    %v488 = vld [vmem:[%s479 + $0x40] sm:$0xff]
    %v489 = vld [vmem:[%s479 + $0x48] sm:$0xff]
    %v490 = vld [vmem:[%s479 + $0x50] sm:$0xff]
    %v491 = vld [vmem:[%s479 + $0x58] sm:$0xff]
    %v492 = vld [vmem:[%s479 + $0x60] sm:$0xff]
    %v493 = vld [vmem:[%s479 + $0x68] sm:$0xff]
    %v494 = vld [vmem:[%s479 + $0x70] sm:$0xff]
    %v495 = vld [vmem:[%s479 + $0x78] sm:$0xff]
    %496 = vmatpush.msra.mxu0 %v495
    %497 = vmatpush.msra.mxu0 %v494
    %498 = vmatpush.msra.mxu0 %v493
    %499 = vmatpush.msra.mxu0 %v492
    %500 = vmatpush.msra.mxu0 %v491
    %501 = vmatpush.msra.mxu0 %v490
    %502 = vmatpush.msra.mxu0 %v489
    %503 = vmatpush.msra.mxu0 %v488
    %504 = vmatpush.msra.mxu0 %v487
    %505 = vmatpush.msra.mxu0 %v486
    %506 = vmatpush.msra.mxu0 %v485
    %507 = vmatpush.msra.mxu0 %v484
    %508 = vmatpush.msra.mxu0 %v483
    %509 = vmatpush.msra.mxu0 %v482
    %510 = vmatpush.msra.mxu0 %v481
    %511 = vmatpush.msra.mxu0 %v480
    %512 = vmatmul.f32.gmra.mxu0 %v384
    %v513 = vpop.f32.mrf.mxu0
    %v514 = vadd.f32 0.0, %v513
    %515 = vmatmul.f32.gmra.mxu0 %v385
    %v516 = vpop.f32.mrf.mxu0
    %v517 = vadd.f32 0.0, %v516
    %518 = vmatmul.f32.gmra.mxu0 %v386
    %v519 = vpop.f32.mrf.mxu0
    %v520 = vadd.f32 0.0, %v519
    %521 = vmatmul.f32.gmra.mxu0 %v387
    %v522 = vpop.f32.mrf.mxu0
    %v523 = vadd.f32 0.0, %v522
    %524 = vdwg.mxu0
    %v525 = vadd.f32 %v468, %v514
    %v526 = vadd.f32 %v471, %v517
    %v527 = vadd.f32 %v474, %v520
    %v528 = vadd.f32 %v477, %v523
    %529 = vrot.lane.b32.xlu0 %v525, 112
    %v530 = vpop.permute.xlu0 %529
    %531 = vrot.lane.b32.xlu0 %v526, 112
    %v532 = vpop.permute.xlu0 %531
    %533 = vrot.lane.b32.xlu0 %v527, 112
    %v534 = vpop.permute.xlu0 %533
    %535 = vrot.lane.b32.xlu0 %v528, 112
    %v536 = vpop.permute.xlu0 %535
    %v537 = vmax.f32 %v525, %v530
    %v538 = vmax.f32 %v526, %v532
    %v539 = vmax.f32 %v527, %v534
    %v540 = vmax.f32 %v528, %v536
    %v541 = vrot.slane %v537, 2
    %v542 = vrot.slane %v538, 2
    %v543 = vrot.slane %v539, 2
    %v544 = vrot.slane %v540, 2
    %v545 = vsel %vm354, %v543, %v544
    %v546 = vsel %vm354, %v542, %v543
    %v547 = vsel %vm354, %v541, %v542
    %v548 = vsel %vm354, %v544, %v541
    %v549 = vmax.f32 %v537, %v547
    %v550 = vmax.f32 %v538, %v546
    %v551 = vmax.f32 %v539, %v545
    %v552 = vmax.f32 %v540, %v548
    %v553 = vld [vmem:[%s6] sm:$0x1]
    %v555 = vperm.slane %v553, 0
    %v557 = vadd.f32 %v549, %v555
    %v558 = vadd.f32 %v550, %v555
    %v559 = vadd.f32 %v551, %v555
    %v560 = vadd.f32 %v552, %v555
    %v561 = vmax.f32 %v557, 0.0
    %v562 = vmax.f32 %v558, 0.0
    %v563 = vmax.f32 %v559, 0.0
    %v564 = vmax.f32 %v560, 0.0
    %v565 = vld [vmem:[%s8] sm:$0xff]
    %v566 = vld [vmem:[%s8 + $0x8] sm:$0xff]
    %v567 = vld [vmem:[%s8 + $0x10] sm:$0xff]
    %v568 = vld [vmem:[%s8 + $0x18] sm:$0xff]
    %v569 = vld [vmem:[%s8 + $0x20] sm:$0xff]
    %v570 = vld [vmem:[%s8 + $0x28] sm:$0xff]
    %v571 = vld [vmem:[%s8 + $0x30] sm:$0xff]
    %v572 = vld [vmem:[%s8 + $0x38] sm:$0xff]
    %v573 = vld [vmem:[%s8 + $0x40] sm:$0xff]
    %v574 = vld [vmem:[%s8 + $0x48] sm:$0xff]
    %v575 = vld [vmem:[%s8 + $0x50] sm:$0xff]
    %v576 = vld [vmem:[%s8 + $0x58] sm:$0xff]
    %v577 = vld [vmem:[%s8 + $0x60] sm:$0xff]
    %v578 = vld [vmem:[%s8 + $0x68] sm:$0xff]
    %v579 = vld [vmem:[%s8 + $0x70] sm:$0xff]
    %v580 = vld [vmem:[%s8 + $0x78] sm:$0xff]
    %581 = vmatpush.msra.mxu0 %v580
    %582 = vmatpush.msra.mxu0 %v579
    %583 = vmatpush.msra.mxu0 %v578
    %584 = vmatpush.msra.mxu0 %v577
    %585 = vmatpush.msra.mxu0 %v576
    %586 = vmatpush.msra.mxu0 %v575
    %587 = vmatpush.msra.mxu0 %v574
    %588 = vmatpush.msra.mxu0 %v573
    %589 = vmatpush.msra.mxu0 %v572
    %590 = vmatpush.msra.mxu0 %v571
    %591 = vmatpush.msra.mxu0 %v570
    %592 = vmatpush.msra.mxu0 %v569
    %593 = vmatpush.msra.mxu0 %v568
    %594 = vmatpush.msra.mxu0 %v567
    %595 = vmatpush.msra.mxu0 %v566
    %596 = vmatpush.msra.mxu0 %v565
    %597 = vmatmul.f32.gmra.mxu0 %v561
    %v598 = vpop.f32.mrf.mxu0
    %v599 = vadd.f32 0.0, %v598
    %600 = vmatmul.f32.gmra.mxu0 %v562
    %v601 = vpop.f32.mrf.mxu0
    %v602 = vadd.f32 0.0, %v601
    %603 = vmatmul.f32.gmra.mxu0 %v563
    %v604 = vpop.f32.mrf.mxu0
    %v605 = vadd.f32 0.0, %v604
    %606 = vmatmul.f32.gmra.mxu0 %v564
    %v607 = vpop.f32.mrf.mxu0
    %v608 = vadd.f32 0.0, %v607
    %609 = vdwg.mxu0
    %s610 = scalar_lea.vmem %s8, 128
    %v611 = vld [vmem:[%s610] sm:$0xff]
    %v612 = vld [vmem:[%s610 + $0x8] sm:$0xff]
    %v613 = vld [vmem:[%s610 + $0x10] sm:$0xff]
    %v614 = vld [vmem:[%s610 + $0x18] sm:$0xff]
    %v615 = vld [vmem:[%s610 + $0x20] sm:$0xff]
    %v616 = vld [vmem:[%s610 + $0x28] sm:$0xff]
    %v617 = vld [vmem:[%s610 + $0x30] sm:$0xff]
    %v618 = vld [vmem:[%s610 + $0x38] sm:$0xff]
    %v619 = vld [vmem:[%s610 + $0x40] sm:$0xff]
    %v620 = vld [vmem:[%s610 + $0x48] sm:$0xff]
    %v621 = vld [vmem:[%s610 + $0x50] sm:$0xff]
    %v622 = vld [vmem:[%s610 + $0x58] sm:$0xff]
    %v623 = vld [vmem:[%s610 + $0x60] sm:$0xff]
    %v624 = vld [vmem:[%s610 + $0x68] sm:$0xff]
    %v625 = vld [vmem:[%s610 + $0x70] sm:$0xff]
    %v626 = vld [vmem:[%s610 + $0x78] sm:$0xff]
    %627 = vmatpush.msra.mxu0 %v626
    %628 = vmatpush.msra.mxu0 %v625
    %629 = vmatpush.msra.mxu0 %v624
    %630 = vmatpush.msra.mxu0 %v623
    %631 = vmatpush.msra.mxu0 %v622
    %632 = vmatpush.msra.mxu0 %v621
    %633 = vmatpush.msra.mxu0 %v620
    %634 = vmatpush.msra.mxu0 %v619
    %635 = vmatpush.msra.mxu0 %v618
    %636 = vmatpush.msra.mxu0 %v617
    %637 = vmatpush.msra.mxu0 %v616
    %638 = vmatpush.msra.mxu0 %v615
    %639 = vmatpush.msra.mxu0 %v614
    %640 = vmatpush.msra.mxu0 %v613
    %641 = vmatpush.msra.mxu0 %v612
    %642 = vmatpush.msra.mxu0 %v611
    %643 = vmatmul.f32.gmra.mxu0 %v561
    %v644 = vpop.f32.mrf.mxu0
    %v645 = vadd.f32 0.0, %v644
    %646 = vmatmul.f32.gmra.mxu0 %v562
    %v647 = vpop.f32.mrf.mxu0
    %v648 = vadd.f32 0.0, %v647
    %649 = vmatmul.f32.gmra.mxu0 %v563
    %v650 = vpop.f32.mrf.mxu0
    %v651 = vadd.f32 0.0, %v650
    %652 = vmatmul.f32.gmra.mxu0 %v564
    %v653 = vpop.f32.mrf.mxu0
    %v654 = vadd.f32 0.0, %v653
    %655 = vdwg.mxu0
    %s656 = scalar_lea.vmem %s8, 256
    %v657 = vld [vmem:[%s656] sm:$0xff]
    %v658 = vld [vmem:[%s656 + $0x8] sm:$0xff]
    %v659 = vld [vmem:[%s656 + $0x10] sm:$0xff]
    %v660 = vld [vmem:[%s656 + $0x18] sm:$0xff]
    %v661 = vld [vmem:[%s656 + $0x20] sm:$0xff]
    %v662 = vld [vmem:[%s656 + $0x28] sm:$0xff]
    %v663 = vld [vmem:[%s656 + $0x30] sm:$0xff]
    %v664 = vld [vmem:[%s656 + $0x38] sm:$0xff]
    %v665 = vld [vmem:[%s656 + $0x40] sm:$0xff]
    %v666 = vld [vmem:[%s656 + $0x48] sm:$0xff]
    %v667 = vld [vmem:[%s656 + $0x50] sm:$0xff]
    %v668 = vld [vmem:[%s656 + $0x58] sm:$0xff]
    %v669 = vld [vmem:[%s656 + $0x60] sm:$0xff]
    %v670 = vld [vmem:[%s656 + $0x68] sm:$0xff]
    %v671 = vld [vmem:[%s656 + $0x70] sm:$0xff]
    %v672 = vld [vmem:[%s656 + $0x78] sm:$0xff]
    %673 = vmatpush.msra.mxu0 %v672
    %674 = vmatpush.msra.mxu0 %v671
    %675 = vmatpush.msra.mxu0 %v670
    %676 = vmatpush.msra.mxu0 %v669
    %677 = vmatpush.msra.mxu0 %v668
    %678 = vmatpush.msra.mxu0 %v667
    %679 = vmatpush.msra.mxu0 %v666
    %680 = vmatpush.msra.mxu0 %v665
    %681 = vmatpush.msra.mxu0 %v664
    %682 = vmatpush.msra.mxu0 %v663
    %683 = vmatpush.msra.mxu0 %v662
    %684 = vmatpush.msra.mxu0 %v661
    %685 = vmatpush.msra.mxu0 %v660
    %686 = vmatpush.msra.mxu0 %v659
    %687 = vmatpush.msra.mxu0 %v658
    %688 = vmatpush.msra.mxu0 %v657
    %689 = vmatmul.f32.gmra.mxu0 %v561
    %v690 = vpop.f32.mrf.mxu0
    %v691 = vadd.f32 0.0, %v690
    %692 = vmatmul.f32.gmra.mxu0 %v562
    %v693 = vpop.f32.mrf.mxu0
    %v694 = vadd.f32 0.0, %v693
    %695 = vmatmul.f32.gmra.mxu0 %v563
    %v696 = vpop.f32.mrf.mxu0
    %v697 = vadd.f32 0.0, %v696
    %698 = vmatmul.f32.gmra.mxu0 %v564
    %v699 = vpop.f32.mrf.mxu0
    %v700 = vadd.f32 0.0, %v699
    %701 = vdwg.mxu0
    %s702 = scalar_lea.vmem %s8, 384
    %v703 = vld [vmem:[%s702] sm:$0xff]
    %v704 = vld [vmem:[%s702 + $0x8] sm:$0xff]
    %v705 = vld [vmem:[%s702 + $0x10] sm:$0xff]
    %v706 = vld [vmem:[%s702 + $0x18] sm:$0xff]
    %v707 = vld [vmem:[%s702 + $0x20] sm:$0xff]
    %v708 = vld [vmem:[%s702 + $0x28] sm:$0xff]
    %v709 = vld [vmem:[%s702 + $0x30] sm:$0xff]
    %v710 = vld [vmem:[%s702 + $0x38] sm:$0xff]
    %v711 = vld [vmem:[%s702 + $0x40] sm:$0xff]
    %v712 = vld [vmem:[%s702 + $0x48] sm:$0xff]
    %v713 = vld [vmem:[%s702 + $0x50] sm:$0xff]
    %v714 = vld [vmem:[%s702 + $0x58] sm:$0xff]
    %v715 = vld [vmem:[%s702 + $0x60] sm:$0xff]
    %v716 = vld [vmem:[%s702 + $0x68] sm:$0xff]
    %v717 = vld [vmem:[%s702 + $0x70] sm:$0xff]
    %v718 = vld [vmem:[%s702 + $0x78] sm:$0xff]
    %719 = vmatpush.msra.mxu0 %v718
    %720 = vmatpush.msra.mxu0 %v717
    %721 = vmatpush.msra.mxu0 %v716
    %722 = vmatpush.msra.mxu0 %v715
    %723 = vmatpush.msra.mxu0 %v714
    %724 = vmatpush.msra.mxu0 %v713
    %725 = vmatpush.msra.mxu0 %v712
    %726 = vmatpush.msra.mxu0 %v711
    %727 = vmatpush.msra.mxu0 %v710
    %728 = vmatpush.msra.mxu0 %v709
    %729 = vmatpush.msra.mxu0 %v708
    %730 = vmatpush.msra.mxu0 %v707
    %731 = vmatpush.msra.mxu0 %v706
    %732 = vmatpush.msra.mxu0 %v705
    %733 = vmatpush.msra.mxu0 %v704
    %734 = vmatpush.msra.mxu0 %v703
    %735 = vmatmul.f32.gmra.mxu0 %v561
    %v736 = vpop.f32.mrf.mxu0
    %v737 = vadd.f32 0.0, %v736
    %738 = vmatmul.f32.gmra.mxu0 %v562
    %v739 = vpop.f32.mrf.mxu0
    %v740 = vadd.f32 0.0, %v739
    %741 = vmatmul.f32.gmra.mxu0 %v563
    %v742 = vpop.f32.mrf.mxu0
    %v743 = vadd.f32 0.0, %v742
    %744 = vmatmul.f32.gmra.mxu0 %v564
    %v745 = vpop.f32.mrf.mxu0
    %v746 = vadd.f32 0.0, %v745
    %747 = vdwg.mxu0
    %v748 = vld [vmem:[%s7] sm:$0x3]
    %v749 = vld [vmem:[%s9] sm:$0x1]
    %v751 = vperm.slane %v749, 0
    %753 = vmatpush.msra.mxu0 %v746
    %754 = vmatpush.msra.mxu0 %v743
    %755 = vmatpush.msra.mxu0 %v740
    %756 = vmatpush.msra.mxu0 %v737
    %757 = vmatpush.msra.mxu0 %v700
    %758 = vmatpush.msra.mxu0 %v697
    %759 = vmatpush.msra.mxu0 %v694
    %760 = vmatpush.msra.mxu0 %v691
    %761 = vmatpush.msra.mxu0 %v654
    %762 = vmatpush.msra.mxu0 %v651
    %763 = vmatpush.msra.mxu0 %v648
    %764 = vmatpush.msra.mxu0 %v645
    %765 = vmatpush.msra.mxu0 %v608
    %766 = vmatpush.msra.mxu0 %v605
    %767 = vmatpush.msra.mxu0 %v602
    %768 = vmatpush.msra.mxu0 %v599
    %769 = vmatmul.f32.gmra.mxu0 %v748
    %v770 = vpop.f32.mrf.mxu0
    %v771 = vadd.f32 %v751, %v770
    %772 = vdwg.mxu0
    %v773 = vmax.f32 %v771, 0.0
    %v774 = vld [vmem:[%s10] sm:$0xff]
    %v775 = vld [vmem:[%s10 + $0x8] sm:$0xff]
    %v776 = vld [vmem:[%s10 + $0x10] sm:$0xff]
    %v777 = vld [vmem:[%s10 + $0x18] sm:$0xff]
    %v778 = vld [vmem:[%s11] sm:$0x1]
    %v780 = vperm.slane %v778, 0
    %vm782 = vcmask 261120
    %v784 = vsel %vm782, %v773, 0
    %786 = vmatpush.msra.mxu0 0.0
    %787 = vmatpush.msra.mxu0 0.0
    %788 = vmatpush.msra.mxu0 0.0
    %789 = vmatpush.msra.mxu0 0.0
    %790 = vmatpush.msra.mxu0 0.0
    %791 = vmatpush.msra.mxu0 0.0
    %792 = vmatpush.msra.mxu0 0.0
    %793 = vmatpush.msra.mxu0 0.0
    %794 = vmatpush.msra.mxu0 0.0
    %795 = vmatpush.msra.mxu0 0.0
    %796 = vmatpush.msra.mxu0 0.0
    %797 = vmatpush.msra.mxu0 0.0
    %798 = vmatpush.msra.mxu0 %v777
    %799 = vmatpush.msra.mxu0 %v776
    %800 = vmatpush.msra.mxu0 %v775
    %801 = vmatpush.msra.mxu0 %v774
    %802 = vmatmul.f32.gmra.mxu0 %v784
    %v803 = vpop.f32.mrf.mxu0
    %v804 = vadd.f32 %v780, %v803
    %805 = vdwg.mxu0
    %vm806 = vcmask 17408
    %v807 = vsel %vm806, %v804, -inf
    %808 = vmax.xlane.f32.xlu0 %v807
    %v809 = vpop.xlane.xlu0 %808
    %v810 = vsub.f32 %v804, %v809
    %v811 = vmul.f32 %v810, 1.442695
    %v812 = vpow.pop %v811
    %v813 = vsel %vm806, %v812, 0.0
    %814 = vadd.xlane.f32.xlu0 %v813
    %v815 = vpop.xlane.xlu0 %814
    %v816 = vrcp.pop %v815
    %v817 = vmul.f32 %v815, %v816
    %v818 = vsub.f32 1.0, %v817
    %v819 = vmul.f32 %v816, %v818
    %v820 = vadd.f32 %v816, %v819
    %vm821 = vweird.f32 %v815
    %vm822 = vweird.f32 %v816
    %vm823 = vmor %vm821, %vm822
    %v824 = vsel %vm823, %v816, %v820
    %v825 = vand.u32 2147483647, %v815
    %vm826 = vcmp.eq.f32.partialorder %v825, 8.507059e+37
    %v827 = vand.u32 %v815, 2147483648
    %v828 = vor.u32 1.1754944e-38, %v827
    %v829 = vsel %vm826, %v828, %v824
    %v830 = vmul.f32 %v812, %v829
    %831 = vst.msk [vmem:[#allocation2] sm:$0x3] %vm806, %v830
    // Predicated region
    $region50: #{tpu_custom_call.1} parent=1 // pred_check
      _
    $region51: #{tpu_custom_call.1} parent=1 // pred_check_branch
      %833 = sbr.rel (0) target = $region53
    $region52: #{tpu_custom_call.1} parent=1 // pred_region
      %835 = vsyncadd [#allocation3], 0
      %s837 = sshll.u32 [#allocation2], 4
      %s838 = int_to_ptr.vmem [resolvable:$true] %s837
      %s839 = sshll.u32 %s12, 4
      %s840 = int_to_ptr.hbm [resolvable:$true] %s839
      %842 = dma.vmem_to_hbm [thread:$0]  %s838, 32, %s840, [#allocation3]
    $region53: #{tpu_custom_call.1} parent=1 // pred_fallthru
      _
    // Predicated region
    $region54: #{tpu_custom_call.1} parent=1 // pred_check
      _
    $region55: #{tpu_custom_call.1} parent=1 // pred_check_branch
      %844 = sbr.rel (0) target = $region57
    $region56: #{tpu_custom_call.1} parent=1 // pred_region
      %846 = dma.done [#allocation3], 32
    $region57: #{tpu_custom_call.1} parent=1 // pred_fallthru
      _
    %847 = vsyncpa [#allocation3], 1

</llo_original>
